<compile_context>
chip_gen: v5e
topology: v5e:2x2
jax: 0.10.0
libtpu: 0.0.40
codegen_flags: <defaults>
</compile_context>

<pallas_src>
import functools

import jax
import jax.numpy as jnp
from jax.experimental import pallas as pl
from jax.experimental.pallas import tpu as pltpu


# ---------------------------------------------------------------------------
# Pallas kernel: full SELayer forward for one batch element
# ---------------------------------------------------------------------------

def _se_kernel(x_ref, w1_ref, b1_ref, w2_ref, b2_ref, o_ref, *, inv_hw):
    """x_ref/o_ref: (1, C, H*W)   w1: (C, Cr)  b1: (1, Cr)  w2: (Cr, C)  b2: (1, C)."""
    x = x_ref[...]                                          # (1, C, HW) f32

    # Global average pool over the spatial (lane) axis -> (1, C).
    pooled = jnp.sum(x, axis=-1) * inv_hw

    # Squeeze-and-excitation MLP (tiny matmuls, f32 accumulation on the MXU).
    h = jnp.dot(pooled, w1_ref[...], preferred_element_type=jnp.float32) + b1_ref[...]
    h = jnp.maximum(h, 0.0)                                 # ReLU
    y = jnp.dot(h, w2_ref[...], preferred_element_type=jnp.float32) + b2_ref[...]
    y = 1.0 / (1.0 + jnp.exp(-y))                           # sigmoid (EUP exp)

    # Channel-wise re-scale, broadcast over the spatial lane axis.
    o_ref[...] = x * y[:, :, None]


# ---------------------------------------------------------------------------
# Wrapper
# ---------------------------------------------------------------------------

def se_layer(x_nchw, w1, b1, w2, b2):
    """SELayer forward.  x_nchw: (B, C, H, W) f32; weights in (in, out) layout."""
    B, C, H, W = x_nchw.shape
    Cr = w1.shape[-1]
    HW = H * W
    x_flat = x_nchw.reshape(B, C, HW)

    # TODO(synk): for extremely large H*W (per-batch slab > ~tens of MiB) add a
    # second grid axis over spatial tiles with a two-pass (reduce, then scale)
    # structure; unnecessary at typical SE-layer activation sizes.
    kernel = functools.partial(_se_kernel, inv_hw=1.0 / float(HW))
    out = pl.pallas_call(
        kernel,
        out_shape=jax.ShapeDtypeStruct((B, C, HW), x_nchw.dtype),
        grid_spec=pltpu.PrefetchScalarGridSpec(
            num_scalar_prefetch=0,
            grid=(B,),
            in_specs=[
                pl.BlockSpec((1, C, HW), lambda b: (b, 0, 0)),   # x (one batch)
                pl.BlockSpec((C, Cr), lambda b: (0, 0)),          # fc1 weight
                pl.BlockSpec((1, Cr), lambda b: (0, 0)),          # fc1 bias
                pl.BlockSpec((Cr, C), lambda b: (0, 0)),          # fc2 weight
                pl.BlockSpec((1, C), lambda b: (0, 0)),           # fc2 bias
            ],
            out_specs=pl.BlockSpec((1, C, HW), lambda b: (b, 0, 0)),
        ),
        compiler_params=pltpu.CompilerParams(
            dimension_semantics=("parallel",),
            vmem_limit_bytes=64 << 20,
        ),
    )(x_flat, w1, b1, w2, b2)
    return out.reshape(B, C, H, W)


# ---------------------------------------------------------------------------
# Parameters (PyTorch nn.Linear default uniform init, deterministic)
# ---------------------------------------------------------------------------

def init_se_params(key, channel, reduction=8):
    c_red = channel // reduction
    k1w, k1b, k2w, k2b = jax.random.split(key, 4)
    bound1 = 1.0 / (channel ** 0.5)
    bound2 = 1.0 / (c_red ** 0.5)
    w1 = jax.random.uniform(k1w, (channel, c_red), jnp.float32, -bound1, bound1)
    b1 = jax.random.uniform(k1b, (1, c_red), jnp.float32, -bound1, bound1)
    w2 = jax.random.uniform(k2w, (c_red, channel), jnp.float32, -bound2, bound2)
    b2 = jax.random.uniform(k2b, (1, channel), jnp.float32, -bound2, bound2)
    return w1, b1, w2, b2


# ---------------------------------------------------------------------------
# Pure-JAX reference (mirrors the PyTorch module)
# ---------------------------------------------------------------------------

def se_layer_ref(x, w1, b1, w2, b2):
    pooled = jnp.mean(x, axis=(2, 3))                 # (B, C)
    h = jnp.maximum(pooled @ w1 + b1, 0.0)
    y = jax.nn.sigmoid(h @ w2 + b2)
    return x * y[:, :, None, None]


# ---------------------------------------------------------------------------
# Main
# ---------------------------------------------------------------------------

if __name__ == "__main__":
    key = jax.random.PRNGKey(0)
    k_params, k_input = jax.random.split(key)

    B, C, H, W = 2, 32, 16, 16     # channel=32, reduction=8 -> hidden=4
    w1, b1, w2, b2 = init_se_params(k_params, C, reduction=8)
    x = jax.random.normal(k_input, (B, C, H, W), jnp.float32)

    out = jax.jit(se_layer)(x, w1, b1, w2, b2)
    out = jax.block_until_ready(out)

    ref = se_layer_ref(x, w1, b1, w2, b2)

    assert out.shape == (B, C, H, W), out.shape
    assert out.dtype == jnp.float32
    assert bool(jnp.all(jnp.isfinite(out)))
    assert bool(jnp.allclose(out, ref, rtol=1e-5, atol=1e-5)), float(
        jnp.max(jnp.abs(out - ref)))
    print("KERNEL_OK")
</pallas_src>

<mosaic_0001>
module attributes {stable_mosaic.version = 11 : i64} {
  func.func @_se_kernel(%arg0: i32, %arg1: memref<1x32x256xf32, #tpu.memory_space<vmem>>, %arg2: memref<32x4xf32, #tpu.memory_space<vmem>>, %arg3: memref<1x4xf32, #tpu.memory_space<vmem>>, %arg4: memref<4x32xf32, #tpu.memory_space<vmem>>, %arg5: memref<1x32xf32, #tpu.memory_space<vmem>>, %arg6: memref<1x32x256xf32, #tpu.memory_space<vmem>>) attributes {dimension_semantics = [#tpu.dimension_semantics<parallel>], iteration_bounds = array<i64: 2>, scalar_prefetch = 0 : i64, scratch_operands = 0 : i64, tpu.core_type = #tpu.core_type<tc>, window_params = [{transform_indices = @transform_0, window_bounds = array<i64: 1, 32, 256>}, {pipeline_mode = #tpu.pipeline_mode<synchronous>, transform_indices = @transform_1, window_bounds = array<i64: 32, 4>}, {pipeline_mode = #tpu.pipeline_mode<synchronous>, transform_indices = @transform_2, window_bounds = array<i64: 1, 4>}, {pipeline_mode = #tpu.pipeline_mode<synchronous>, transform_indices = @transform_3, window_bounds = array<i64: 4, 32>}, {pipeline_mode = #tpu.pipeline_mode<synchronous>, transform_indices = @transform_4, window_bounds = array<i64: 1, 32>}, {transform_indices = @transform_5, window_bounds = array<i64: 1, 32, 256>}]} {
    %c0 = arith.constant 0 : index
    %c0_0 = arith.constant 0 : index
    %c0_1 = arith.constant 0 : index
    %0 = vector.load %arg1[%c0, %c0_0, %c0_1] : memref<1x32x256xf32, #tpu.memory_space<vmem>>, vector<1x32x256xf32>
    %cst = arith.constant dense<0.000000e+00> : vector<1x32xf32>
    %1 = vector.multi_reduction <add>, %0, %cst [2] : vector<1x32x256xf32> to vector<1x32xf32>
    %cst_2 = arith.constant 3.906250e-03 : f32
    %2 = vector.broadcast %cst_2 : f32 to vector<1x32xf32>
    %3 = arith.mulf %1, %2 : vector<1x32xf32>
    %c0_3 = arith.constant 0 : index
    %c0_4 = arith.constant 0 : index
    %4 = vector.load %arg2[%c0_3, %c0_4] : memref<32x4xf32, #tpu.memory_space<vmem>>, vector<32x4xf32>
    %cst_5 = arith.constant dense<0.000000e+00> : vector<1x4xf32>
    %5 = tpu.matmul %3, %4, %cst_5 {dimension_numbers = #tpu.dot_dimension_numbers<[1], [0], [0], [1], [0, 0, 1, 1], [], []>} : vector<1x32xf32>, vector<32x4xf32>, vector<1x4xf32> -> vector<1x4xf32>
    %c0_6 = arith.constant 0 : index
    %c0_7 = arith.constant 0 : index
    %6 = vector.load %arg3[%c0_6, %c0_7] : memref<1x4xf32, #tpu.memory_space<vmem>>, vector<1x4xf32>
    %7 = arith.addf %5, %6 : vector<1x4xf32>
    %cst_8 = arith.constant 0.000000e+00 : f32
    %8 = vector.broadcast %cst_8 : f32 to vector<1x4xf32>
    %9 = arith.maximumf %7, %8 : vector<1x4xf32>
    %c0_9 = arith.constant 0 : index
    %c0_10 = arith.constant 0 : index
    %10 = vector.load %arg4[%c0_9, %c0_10] : memref<4x32xf32, #tpu.memory_space<vmem>>, vector<4x32xf32>
    %cst_11 = arith.constant dense<0.000000e+00> : vector<1x32xf32>
    %11 = tpu.matmul %9, %10, %cst_11 {dimension_numbers = #tpu.dot_dimension_numbers<[1], [0], [0], [1], [0, 0, 1, 1], [], []>} : vector<1x4xf32>, vector<4x32xf32>, vector<1x32xf32> -> vector<1x32xf32>
    %c0_12 = arith.constant 0 : index
    %c0_13 = arith.constant 0 : index
    %12 = vector.load %arg5[%c0_12, %c0_13] : memref<1x32xf32, #tpu.memory_space<vmem>>, vector<1x32xf32>
    %13 = arith.addf %11, %12 : vector<1x32xf32>
    %cst_14 = arith.constant 0.000000e+00 : f32
    %14 = vector.broadcast %cst_14 : f32 to vector<1x32xf32>
    %15 = arith.subf %14, %13 : vector<1x32xf32>
    %16 = math.exp %15 : vector<1x32xf32>
    %cst_15 = arith.constant 1.000000e+00 : f32
    %17 = vector.broadcast %cst_15 : f32 to vector<1x32xf32>
    %18 = arith.addf %17, %16 : vector<1x32xf32>
    %cst_16 = arith.constant 1.000000e+00 : f32
    %19 = vector.broadcast %cst_16 : f32 to vector<1x32xf32>
    %20 = arith.divf %19, %18 : vector<1x32xf32>
    %21 = vector.shape_cast %20 : vector<1x32xf32> to vector<1x32x1xf32>
    %22 = vector.broadcast %21 : vector<1x32x1xf32> to vector<1x32x256xf32>
    %23 = arith.mulf %0, %22 : vector<1x32x256xf32>
    %c0_17 = arith.constant 0 : index
    %c0_18 = arith.constant 0 : index
    %c0_19 = arith.constant 0 : index
    %24 = vector.load %arg6[%c0_17, %c0_18, %c0_19] : memref<1x32x256xf32, #tpu.memory_space<vmem>>, vector<1x32x256xf32>
    tpu.vector_store %arg6[%c0_17, %c0_18, %c0_19], %23 {strides = array<i32>} : memref<1x32x256xf32, #tpu.memory_space<vmem>>, vector<1x32x256xf32>,
    return
  }
  func.func @transform_0(%arg0: i32) -> (i32, i32, i32) {
    %c0_i32 = arith.constant 0 : i32
    %c0_i32_0 = arith.constant 0 : i32
    %c0_i32_1 = arith.constant 0 : i32
    return %arg0, %c0_i32, %c0_i32_0 : i32, i32, i32
  }
  func.func @transform_1(%arg0: i32) -> (i32, i32) {
    %c0_i32 = arith.constant 0 : i32
    %c0_i32_0 = arith.constant 0 : i32
    %c0_i32_1 = arith.constant 0 : i32
    return %c0_i32, %c0_i32_0 : i32, i32
  }
  func.func @transform_2(%arg0: i32) -> (i32, i32) {
    %c0_i32 = arith.constant 0 : i32
    %c0_i32_0 = arith.constant 0 : i32
    %c0_i32_1 = arith.constant 0 : i32
    return %c0_i32, %c0_i32_0 : i32, i32
  }
  func.func @transform_3(%arg0: i32) -> (i32, i32) {
    %c0_i32 = arith.constant 0 : i32
    %c0_i32_0 = arith.constant 0 : i32
    %c0_i32_1 = arith.constant 0 : i32
    return %c0_i32, %c0_i32_0 : i32, i32
  }
  func.func @transform_4(%arg0: i32) -> (i32, i32) {
    %c0_i32 = arith.constant 0 : i32
    %c0_i32_0 = arith.constant 0 : i32
    %c0_i32_1 = arith.constant 0 : i32
    return %c0_i32, %c0_i32_0 : i32, i32
  }
  func.func @transform_5(%arg0: i32) -> (i32, i32, i32) {
    %c0_i32 = arith.constant 0 : i32
    %c0_i32_0 = arith.constant 0 : i32
    %c0_i32_1 = arith.constant 0 : i32
    return %arg0, %c0_i32, %c0_i32_0 : i32, i32, i32
  }
}

</mosaic_0001>

<llo_original>
// kernel: se_layer.1
$region0: #{se_layer.1}
  #allocation0 [shape = 'u32[]', space=smem, size = 0x4, offset = 0x4, fixed_abs, tag = 'smem constant byte address 0x4 - core index']
  #allocation1 [shape = 'u32[72,128]{1,0:T(1,128)}', space=vmem, size = 0x9000, scoped, tag = 'internal scratch']
  %s0 = inlined_call_operand.vmem [shape: f32[2,32,256], index: 0, kind: input, shape index: {}]
  %s1 = inlined_call_operand.vmem [shape: f32[32,4], index: 1, kind: input, shape index: {}]
  %s2 = inlined_call_operand.vmem [shape: f32[1,4], index: 2, kind: input, shape index: {}]
  %s3 = inlined_call_operand.vmem [shape: f32[4,32], index: 3, kind: input, shape index: {}]
  %s4 = inlined_call_operand.vmem [shape: f32[1,32], index: 4, kind: input, shape index: {}]
  %s5 = inlined_call_operand.vmem [shape: f32[2,32,256], index: 5, kind: output, shape index: {}]
  %s6 = sld [smem:[#allocation0]]
  $region53: #{se_layer.1} parent=0
    _
  %s8 = ssub.s32 1, %s6
  %s9 = scalar_select 0, %s8, %s6
  loop: start=0, step=1, limit=4
  $region2: #{se_layer.1} parent=0 // loop_pre_header
    _
  $region3: #{se_layer.1} parent=0 // loop_header
    %s11 = sphi 0, %s15
    %p12 = scmp.ge.s32.totalorder %s11, 4
    %s21 = sphi 0, %s23
    %s24 = sphi 0, %s21
    %s25 = sphi 0, %s24
    %s41 = sphi 0, %s25
    %s45 = sphi 0, %s45
    %s47 = sphi 0, %s45
    %s48 = sphi 0, %s47
    %s62 = sphi 0, %s48
    %s66 = sphi 0, %s66
    %s68 = sphi 0, %s66
    %s69 = sphi 0, %s68
    %s83 = sphi 0, %s69
    %s87 = sphi 0, %s87
    %s89 = sphi 0, %s87
    %s90 = sphi 0, %s89
    %s104 = sphi 0, %s90
    %s108 = sphi 0, %s108
    %s110 = sphi 0, %s108
    %s111 = sphi 0, %s110
    %s125 = sphi 0, %s111
    %s131 = sphi 0, %s133
    %s134 = sphi 0, %s131
    %s135 = sphi 0, %s134
    %s151 = sphi 0, %s135
  $region4: #{se_layer.1} parent=0 // loop_header_branch
    %14 = sbr.rel (%p12) target = $region8
  $region5: #{se_layer.1} parent=0 // loop_body
    %s16 = ssub.s32 %s11, 1
    %s17 = ssub.s32 %s11, 2
    %s18 = sadd.s32 %s11, 1
    %s19 = ssub.s32 %s11, %s18
    %p20 = scmp.eq.s32.totalorder %s19, 0
    %s22 = sadd.s32 %s21, 1
    %s23 = scalar_select %p20, %s21, %s22
    %p26 = pneg %p20
    %p27 = scmp.eq.s32.totalorder %s11, 1
    %p28 = por %p26, %p27
    %p29 = scmp.ne.s32.totalorder %s21, %s24
    %p30 = scmp.eq.s32.totalorder %s11, 0
    %p31 = por %p29, %p30
    %p32 = scmp.ne.s32.totalorder %s21, %s24
    %p33 = scmp.eq.s32.totalorder %s16, 1
    %p34 = por %p32, %p33
    %p35 = scmp.ne.s32.totalorder %s24, %s25
    %p36 = scmp.eq.s32.totalorder %s16, 0
    %p37 = por %p35, %p36
    %p38 = scmp.ne.s32.totalorder %s24, %s25
    %p39 = scmp.eq.s32.totalorder %s17, 1
    %p40 = por %p38, %p39
    %p42 = scmp.ne.s32.totalorder %s25, %s41
    %p43 = scmp.eq.s32.totalorder %s17, 0
    %p44 = por %p42, %p43
    %s46 = sadd.s32 %s45, 1
    %p49 = scmp.eq.s32.totalorder %s11, 1
    %p50 = scmp.ne.s32.totalorder %s45, %s47
    %p51 = scmp.eq.s32.totalorder %s11, 0
    %p52 = por %p50, %p51
    %p53 = scmp.ne.s32.totalorder %s45, %s47
    %p54 = scmp.eq.s32.totalorder %s16, 1
    %p55 = por %p53, %p54
    %p56 = scmp.ne.s32.totalorder %s47, %s48
    %p57 = scmp.eq.s32.totalorder %s16, 0
    %p58 = por %p56, %p57
    %p59 = scmp.ne.s32.totalorder %s47, %s48
    %p60 = scmp.eq.s32.totalorder %s17, 1
    %p61 = por %p59, %p60
    %p63 = scmp.ne.s32.totalorder %s48, %s62
    %p64 = scmp.eq.s32.totalorder %s17, 0
    %p65 = por %p63, %p64
    %s67 = sadd.s32 %s66, 1
    %p70 = scmp.eq.s32.totalorder %s11, 1
    %p71 = scmp.ne.s32.totalorder %s66, %s68
    %p72 = scmp.eq.s32.totalorder %s11, 0
    %p73 = por %p71, %p72
    %p74 = scmp.ne.s32.totalorder %s66, %s68
    %p75 = scmp.eq.s32.totalorder %s16, 1
    %p76 = por %p74, %p75
    %p77 = scmp.ne.s32.totalorder %s68, %s69
    %p78 = scmp.eq.s32.totalorder %s16, 0
    %p79 = por %p77, %p78
    %p80 = scmp.ne.s32.totalorder %s68, %s69
    %p81 = scmp.eq.s32.totalorder %s17, 1
    %p82 = por %p80, %p81
    %p84 = scmp.ne.s32.totalorder %s69, %s83
    %p85 = scmp.eq.s32.totalorder %s17, 0
    %p86 = por %p84, %p85
    %s88 = sadd.s32 %s87, 1
    %p91 = scmp.eq.s32.totalorder %s11, 1
    %p92 = scmp.ne.s32.totalorder %s87, %s89
    %p93 = scmp.eq.s32.totalorder %s11, 0
    %p94 = por %p92, %p93
    %p95 = scmp.ne.s32.totalorder %s87, %s89
    %p96 = scmp.eq.s32.totalorder %s16, 1
    %p97 = por %p95, %p96
    %p98 = scmp.ne.s32.totalorder %s89, %s90
    %p99 = scmp.eq.s32.totalorder %s16, 0
    %p100 = por %p98, %p99
    %p101 = scmp.ne.s32.totalorder %s89, %s90
    %p102 = scmp.eq.s32.totalorder %s17, 1
    %p103 = por %p101, %p102
    %p105 = scmp.ne.s32.totalorder %s90, %s104
    %p106 = scmp.eq.s32.totalorder %s17, 0
    %p107 = por %p105, %p106
    %s109 = sadd.s32 %s108, 1
    %p112 = scmp.eq.s32.totalorder %s11, 1
    %p113 = scmp.ne.s32.totalorder %s108, %s110
    %p114 = scmp.eq.s32.totalorder %s11, 0
    %p115 = por %p113, %p114
    %p116 = scmp.ne.s32.totalorder %s108, %s110
    %p117 = scmp.eq.s32.totalorder %s16, 1
    %p118 = por %p116, %p117
    %p119 = scmp.ne.s32.totalorder %s110, %s111
    %p120 = scmp.eq.s32.totalorder %s16, 0
    %p121 = por %p119, %p120
    %p122 = scmp.ne.s32.totalorder %s110, %s111
    %p123 = scmp.eq.s32.totalorder %s17, 1
    %p124 = por %p122, %p123
    %p126 = scmp.ne.s32.totalorder %s111, %s125
    %p127 = scmp.eq.s32.totalorder %s17, 0
    %p128 = por %p126, %p127
    %s129 = ssub.s32 %s11, %s18
    %p130 = scmp.eq.s32.totalorder %s129, 0
    %s132 = sadd.s32 %s131, 1
    %s133 = scalar_select %p130, %s131, %s132
    %p136 = pneg %p130
    %p137 = scmp.eq.s32.totalorder %s11, 1
    %p138 = por %p136, %p137
    %p139 = scmp.ne.s32.totalorder %s131, %s134
    %p140 = scmp.eq.s32.totalorder %s11, 0
    %p141 = por %p139, %p140
    %p142 = scmp.ne.s32.totalorder %s131, %s134
    %p143 = scmp.eq.s32.totalorder %s16, 1
    %p144 = por %p142, %p143
    %p145 = scmp.ne.s32.totalorder %s134, %s135
    %p146 = scmp.eq.s32.totalorder %s16, 0
    %p147 = por %p145, %p146
    %p148 = scmp.ne.s32.totalorder %s134, %s135
    %p149 = scmp.eq.s32.totalorder %s17, 1
    %p150 = por %p148, %p149
    %p152 = scmp.ne.s32.totalorder %s135, %s151
    %p153 = scmp.eq.s32.totalorder %s17, 0
    %p154 = por %p152, %p153
    %p155 = scmp.le.s32.totalorder 1, %s11
    %p156 = scmp.lt.s32.totalorder %s11, 3
    %p157 = pnand %p155, %p156
    %p158 = pneg %p157
    // Predicated region
    $region9: #{se_layer.1} parent=5 // pred_check
      _
    $region10: #{se_layer.1} parent=5 // pred_check_branch
      %160 = sbr.rel (%p157) target = $region12
    $region11: #{se_layer.1} parent=5 // pred_region
      %s161 = ssub.s32 %s11, 1
      // Predicated region
      $region13: #{se_layer.1} parent=11 // pred_check
        %p162 = pneg %p58
      $region14: #{se_layer.1} parent=11 // pred_check_branch
        %164 = sbr.rel (%p162) target = $region16
      $region15: #{se_layer.1} parent=11 // pred_region
        _
      $region16: #{se_layer.1} parent=11 // pred_fallthru
        _
      // Predicated region
      $region17: #{se_layer.1} parent=11 // pred_check
        %p165 = pneg %p79
      $region18: #{se_layer.1} parent=11 // pred_check_branch
        %167 = sbr.rel (%p165) target = $region20
      $region19: #{se_layer.1} parent=11 // pred_region
        _
      $region20: #{se_layer.1} parent=11 // pred_fallthru
        _
      // Predicated region
      $region21: #{se_layer.1} parent=11 // pred_check
        %p168 = pneg %p100
      $region22: #{se_layer.1} parent=11 // pred_check_branch
        %170 = sbr.rel (%p168) target = $region24
      $region23: #{se_layer.1} parent=11 // pred_region
        _
      $region24: #{se_layer.1} parent=11 // pred_fallthru
        _
      // Predicated region
      $region25: #{se_layer.1} parent=11 // pred_check
        %p171 = pneg %p121
      $region26: #{se_layer.1} parent=11 // pred_check_branch
        %173 = sbr.rel (%p171) target = $region28
      $region27: #{se_layer.1} parent=11 // pred_region
        _
      $region28: #{se_layer.1} parent=11 // pred_fallthru
        _
    $region12: #{se_layer.1} parent=5 // pred_fallthru
      _
    %p174 = scmp.lt.s32.totalorder %s11, 2
    // Predicated region
    $region29: #{se_layer.1} parent=5 // pred_check
      %p175 = pneg %p174
    $region30: #{se_layer.1} parent=5 // pred_check_branch
      %177 = sbr.rel (%p175) target = $region32
    $region31: #{se_layer.1} parent=5 // pred_region
      // Predicated region
      $region33: #{se_layer.1} parent=31 // pred_check
        %p178 = pneg %p31
      $region34: #{se_layer.1} parent=31 // pred_check_branch
        %180 = sbr.rel (%p178) target = $region36
      $region35: #{se_layer.1} parent=31 // pred_region
        %p181 = scmp.lt.s32.totalorder %s11, 1
        %s182 = scalar_select %p181, %s11, 1
        %s183 = smul.addr %s182, 8
        %s184 = smul.addr %s183, 8
        %s185 = scalar_lea.vmem %s0, %s184
      $region36: #{se_layer.1} parent=31 // pred_fallthru
        _
    $region32: #{se_layer.1} parent=5 // pred_fallthru
      _
    %p186 = scmp.le.s32.totalorder 1, %s11
    %p187 = scmp.lt.s32.totalorder %s11, 3
    %p188 = pnand %p186, %p187
    %p189 = pneg %p188
    // Predicated region
    $region37: #{se_layer.1} parent=5 // pred_check
      _
    $region38: #{se_layer.1} parent=5 // pred_check_branch
      %191 = sbr.rel (%p188) target = $region40
    $region39: #{se_layer.1} parent=5 // pred_region
      %s192 = ssub.s32 %s11, 1
      %p193 = scmp.lt.s32.totalorder %s16, 1
      %s194 = scalar_select %p193, %s16, 1
      %s195 = smul.addr %s194, 8
      %s196 = smul.addr %s195, 8
      %s197 = scalar_lea.vmem %s0, %s196
      %p198 = pneg %p37
      %p199 = pneg %p34
      %p200 = pneg %p58
      %p201 = pneg %p55
      %p202 = pneg %p79
      %p203 = pneg %p76
      %p204 = pneg %p100
      %p205 = pneg %p97
      %p206 = pneg %p121
      %p207 = pneg %p118
      %p208 = pneg %p147
      %p209 = pneg %p144
      %p210 = scmp.lt.s32.totalorder %s16, 1
      %s211 = scalar_select %p210, %s16, 1
      %s212 = smul.addr %s211, 8
      %s213 = smul.addr %s212, 8
      %s214 = scalar_lea.vmem %s5, %s213
      %p215 = scmp.lt.s32.totalorder %s16, 1
      %s216 = scalar_select %p215, %s16, 1
      %s217 = smul.addr %s216, 8
      %s218 = smul.addr %s217, 8
      %s219 = scalar_lea.vmem %s0, %s218
      %p220 = scmp.lt.s32.totalorder %s16, 1
      %s221 = scalar_select %p220, %s16, 1
      %s222 = smul.addr %s221, 8
      %s223 = smul.addr %s222, 8
      %s224 = scalar_lea.vmem %s5, %s223
      %v225 = vld [vmem:[%s219] sm:$0xff]
      %v226 = vld [vmem:[%s219 + $0x8] sm:$0xff]
      %v227 = vld [vmem:[%s219 + $0x10] sm:$0xff]
      %v228 = vld [vmem:[%s219 + $0x18] sm:$0xff]
      %v229 = vld [vmem:[%s219 + $0x20] sm:$0xff]
      %v230 = vld [vmem:[%s219 + $0x28] sm:$0xff]
      %v231 = vld [vmem:[%s219 + $0x30] sm:$0xff]
      %v232 = vld [vmem:[%s219 + $0x38] sm:$0xff]
      %v233 = vadd.f32 %v225, %v226
      %234 = vadd.xlane.f32.xlu0 %v233
      %v235 = vpop.xlane.xlu0 %234
      %v236 = vadd.f32 %v227, %v228
      %237 = vadd.xlane.f32.xlu0 %v236
      %v238 = vpop.xlane.xlu0 %237
      %v239 = vadd.f32 %v229, %v230
      %240 = vadd.xlane.f32.xlu0 %v239
      %v241 = vpop.xlane.xlu0 %240
      %v242 = vadd.f32 %v231, %v232
      %243 = vadd.xlane.f32.xlu0 %v242
      %v244 = vpop.xlane.xlu0 %243
      %v245 = vmul.f32 %v235, 0.00390625
      %v246 = vmul.f32 %v238, 0.00390625
      %v247 = vmul.f32 %v241, 0.00390625
      %v248 = vmul.f32 %v244, 0.00390625
      %v249 = vld [vmem:[%s1] sm:$0xff]
      %v250 = vld [vmem:[%s1 + $0x8] sm:$0xff]
      %v251 = vld [vmem:[%s1 + $0x10] sm:$0xff]
      %v252 = vld [vmem:[%s1 + $0x18] sm:$0xff]
      %v253 = vld [vmem:[%s2] sm:$0x1]
      %v258 = vlaneseq
      %v259 = vand.u32 %v258, 127
      %v260 = vperm.slane %v245, %v259
      %v261 = vadd.s32 %v259, 4294967288
      %v262 = vperm.slane %v246, %v261
      %vm263 = vcmask 130112
      %v264 = vsel %vm263, %v262, %v260
      %v265 = vadd.s32 %v259, 4294967280
      %v266 = vperm.slane %v247, %v265
      %vm267 = vcmask 195712
      %v268 = vsel %vm267, %v266, %v264
      %v269 = vadd.s32 %v259, 4294967272
      %v270 = vperm.slane %v248, %v269
      %vm271 = vcmask 261312
      %v272 = vsel %vm271, %v270, %v268
      %vm273 = vcmask 261120
      %v274 = vsel %vm273, %v272, 0
      %276 = vmatpush.msra.mxu0 0.0
      %277 = vmatpush.msra.mxu0 0.0
      %278 = vmatpush.msra.mxu0 0.0
      %279 = vmatpush.msra.mxu0 0.0
      %280 = vmatpush.msra.mxu0 0.0
      %281 = vmatpush.msra.mxu0 0.0
      %282 = vmatpush.msra.mxu0 0.0
      %283 = vmatpush.msra.mxu0 0.0
      %284 = vmatpush.msra.mxu0 0.0
      %285 = vmatpush.msra.mxu0 0.0
      %286 = vmatpush.msra.mxu0 0.0
      %287 = vmatpush.msra.mxu0 0.0
      %288 = vmatpush.msra.mxu0 %v252
      %289 = vmatpush.msra.mxu0 %v251
      %290 = vmatpush.msra.mxu0 %v250
      %291 = vmatpush.msra.mxu0 %v249
      %292 = vmatmul.f32.gmra.mxu0 %v274
      %v293 = vpop.f32.mrf.mxu0
      %v294 = vadd.f32 %v253, %v293
      %295 = vdwg.mxu0
      %v296 = vmax.f32 %v294, 0.0
      %v297 = vld [vmem:[%s3] sm:$0xf]
      %v298 = vld [vmem:[%s4] sm:$0x1]
      %vm299 = vcmask 31744
      %v301 = vsel %vm299, %v296, 0
      %vm303 = vcmask 1043456
      %v305 = vsel %vm303, %v297, 0
      %307 = vmatpush.msra.mxu0 0.0
      %308 = vmatpush.msra.mxu0 0.0
      %309 = vmatpush.msra.mxu0 0.0
      %310 = vmatpush.msra.mxu0 0.0
      %311 = vmatpush.msra.mxu0 0.0
      %312 = vmatpush.msra.mxu0 0.0
      %313 = vmatpush.msra.mxu0 0.0
      %314 = vmatpush.msra.mxu0 0.0
      %315 = vmatpush.msra.mxu0 0.0
      %316 = vmatpush.msra.mxu0 0.0
      %317 = vmatpush.msra.mxu0 0.0
      %318 = vmatpush.msra.mxu0 0.0
      %319 = vmatpush.msra.mxu0 0.0
      %320 = vmatpush.msra.mxu0 0.0
      %321 = vmatpush.msra.mxu0 0.0
      %322 = vmatpush.msra.mxu0 %v305
      %323 = vmatmul.f32.gmra.mxu0 %v301
      %v324 = vpop.f32.mrf.mxu0
      %v325 = vadd.f32 %v298, %v324
      %326 = vdwg.mxu0
      %v327 = vsub.f32 0.0, %v325
      %v328 = vmul.f32 %v327, 1.442695
      %v329 = vpow.pop %v328
      %v330 = vadd.f32 %v329, 1.0
      %v331 = vrcp.pop %v330
      %v332 = vmul.f32 %v330, %v331
      %v333 = vsub.f32 1.0, %v332
      %v334 = vmul.f32 %v331, %v333
      %v335 = vadd.f32 %v331, %v334
      %vm336 = vweird.f32 %v330
      %vm337 = vweird.f32 %v331
      %vm338 = vmor %vm336, %vm337
      %v339 = vsel %vm338, %v331, %v335
      %v340 = vand.u32 2147483647, %v330
      %vm341 = vcmp.eq.f32.partialorder %v340, 8.507059e+37
      %v342 = vand.u32 %v330, 2147483648
      %v343 = vor.u32 1.1754944e-38, %v342
      %v344 = vsel %vm341, %v343, %v339
      %v345 = vmul.f32 1.0, %v344
      %v346 = vperm.slane %v345, 0
      %v347 = vlaneseq
      %v348 = vshrl.u32 %v347, 7
      %350 = vset.pattern.permute.xlu0 %v348
      %351 = vperm.xlu0 %350, %v346
      %v352 = vpop.permute.xlu0 %351
      %v353 = vlaneseq
      %v354 = vshrl.u32 %v353, 7
      %v355 = vadd.s32 %v354, 8
      %356 = vset.pattern.permute.xlu0 %v355
      %357 = vperm.xlu0 %356, %v346
      %v358 = vpop.permute.xlu0 %357
      %v359 = vlaneseq
      %v360 = vshrl.u32 %v359, 7
      %v361 = vadd.s32 %v360, 16
      %362 = vset.pattern.permute.xlu0 %v361
      %363 = vperm.xlu0 %362, %v346
      %v364 = vpop.permute.xlu0 %363
      %v365 = vlaneseq
      %v366 = vshrl.u32 %v365, 7
      %v367 = vadd.s32 %v366, 24
      %368 = vset.pattern.permute.xlu0 %v367
      %369 = vperm.xlu0 %368, %v346
      %v370 = vpop.permute.xlu0 %369
      %v371 = vmul.f32 %v225, %v352
      %v372 = vmul.f32 %v226, %v352
      %v373 = vmul.f32 %v227, %v358
      %v374 = vmul.f32 %v228, %v358
      %v375 = vmul.f32 %v229, %v364
      %v376 = vmul.f32 %v230, %v364
      %v377 = vmul.f32 %v231, %v370
      %v378 = vmul.f32 %v232, %v370
      %379 = vst [vmem:[%s224] sm:$0xff] %v371
      %380 = vst [vmem:[%s224 + $0x8] sm:$0xff] %v372
      %381 = vst [vmem:[%s224 + $0x10] sm:$0xff] %v373
      %382 = vst [vmem:[%s224 + $0x18] sm:$0xff] %v374
      %383 = vst [vmem:[%s224 + $0x20] sm:$0xff] %v375
      %384 = vst [vmem:[%s224 + $0x28] sm:$0xff] %v376
      %385 = vst [vmem:[%s224 + $0x30] sm:$0xff] %v377
      %386 = vst [vmem:[%s224 + $0x38] sm:$0xff] %v378
      %p387 = scmp.lt.s32.totalorder %s16, 1
      %s388 = scalar_select %p387, %s16, 1
      %s389 = smul.addr %s388, 8
      %s390 = smul.addr %s389, 8
      %s391 = scalar_lea.vmem %s5, %s390
      // Predicated region
      $region41: #{se_layer.1} parent=39 // pred_check
        %p392 = pneg %p144
      $region42: #{se_layer.1} parent=39 // pred_check_branch
        %394 = sbr.rel (%p392) target = $region44
      $region43: #{se_layer.1} parent=39 // pred_region
        _
      $region44: #{se_layer.1} parent=39 // pred_fallthru
        _
    $region40: #{se_layer.1} parent=5 // pred_fallthru
      _
    %p395 = scmp.le.s32.totalorder 2, %s11
    // Predicated region
    $region45: #{se_layer.1} parent=5 // pred_check
      %p396 = pneg %p395
    $region46: #{se_layer.1} parent=5 // pred_check_branch
      %398 = sbr.rel (%p396) target = $region48
    $region47: #{se_layer.1} parent=5 // pred_region
      %s399 = ssub.s32 %s11, 2
      // Predicated region
      $region49: #{se_layer.1} parent=47 // pred_check
        %p400 = pneg %p150
      $region50: #{se_layer.1} parent=47 // pred_check_branch
        %402 = sbr.rel (%p400) target = $region52
      $region51: #{se_layer.1} parent=47 // pred_region
        %p403 = scmp.lt.s32.totalorder %s17, 1
        %s404 = scalar_select %p403, %s17, 1
        %s405 = smul.addr %s404, 8
        %s406 = smul.addr %s405, 8
        %s407 = scalar_lea.vmem %s5, %s406
      $region52: #{se_layer.1} parent=47 // pred_fallthru
        _
    $region48: #{se_layer.1} parent=5 // pred_fallthru
      _
  $region6: #{se_layer.1} parent=0 // loop_footer
    %s15 = sadd.s32 1, %s11
  $region7: #{se_layer.1} parent=0 // loop_footer_branch
    %10 = sbr.rel target = $region3
  $region8: #{se_layer.1} parent=0 // loop_exit
    _

</llo_original>
